<compile_context>
chip_gen: v5e
topology: v5e:2x2
jax: 0.10.0
libtpu: 0.0.40
codegen_flags: <defaults>
</compile_context>

<pallas_src>
import jax
import jax.numpy as jnp
from jax.experimental import pallas as pl
from jax.experimental.pallas import tpu as pltpu


def _sccam_head_kernel(x_ref, w_ref, logit_ref, feat_ref, y_ref):
    # x_ref:     (TB, HW, C)  backbone feature tile, C lane-dense (input dtype)
    # w_ref:     (C, NC)      fc8 1x1-conv weight, pre-transposed, f32
    # logit_ref: (TB, NC)     pre-sigmoid logits (f32)
    # feat_ref:  (TB, C)      global-average-pooled feature (input dtype)
    # y_ref:     (TB, NC)     sigmoid(logits) (f32)

    # F.avg_pool2d over the full spatial extent == mean over HW (sublane axis).
    # dtype=f32 fuses the widening into the reduce: no full f32 temp of the tile.
    pooled = jnp.mean(x_ref[...], axis=1, dtype=jnp.float32)          # (TB, C)
    feat_ref[...] = pooled.astype(feat_ref.dtype)

    # 1x1 conv with no bias on a (TB, C, 1, 1) tensor == dense matmul on the MXU.
    # Weight is already (K=C, N=NC): standard contraction, no RHS layout fixup.
    logits = jax.lax.dot_general(
        pooled, w_ref[...],
        dimension_numbers=(((1,), (0,)), ((), ())),
        preferred_element_type=jnp.float32)                           # (TB, NC)
    logit_ref[...] = logits

    # torch.sigmoid
    y_ref[...] = jax.nn.sigmoid(logits)


def _round_up(x, m):
    return (x + m - 1) // m * m


def _pick_batch_tile(B, in_row_bytes, target_bytes):
    """Batch tile size.  in_row_bytes = bytes of one (sublane/lane padded) batch row of the
    input tile.  Returns a multiple of 8 when B > 8, capped so the grid has >= 2 steps."""
    if B <= 8:
        return B
    tb_bytes = max(8, (target_bytes // max(in_row_bytes, 1)) // 8 * 8)
    # keep >= 2 grid steps so megacore / v7x's two TensorCores both get work
    tb_split = max(8, (pl.cdiv(B, 2) // 8) * 8)
    return int(min(tb_bytes, tb_split, _round_up(B, 8)))


def sccam_head_nhwc(feat_map_bhwc, fc8_weight):
    """feat_map_bhwc: (B, H, W, C) backbone output, channels-last (lane-dense).
    fc8_weight: (num_classes, C, 1, 1) -- nn.Conv2d(C, num_classes, 1, bias=False).
    Returns (logits (B, NC) f32, pooled feature (B, C) in input dtype, sigmoid(logits) (B, NC) f32)."""
    B, H, W, C = feat_map_bhwc.shape
    NC = fc8_weight.shape[0]
    HW = H * W

    x = feat_map_bhwc.reshape(B, HW, C)                  # keep input dtype (bf16 halves HBM reads)
    w = jnp.asarray(fc8_weight, jnp.float32).reshape(NC, C).T   # (C, NC): standard (K, N) MXU feed

    itemsize = x.dtype.itemsize
    sub_granule = max(8, 32 // itemsize)                 # 8 sublanes f32, 16 bf16, 32 int8
    HW_pad = _round_up(HW, sub_granule)                  # sublane padding of the HW axis
    C_pad = _round_up(C, 128)
    NC_pad = _round_up(NC, 128)

    # Physical VMEM of this generation (128 MiB v5e/v6e, 64 MiB per-TC v7x).
    try:
        vmem_capacity = int(pltpu.get_tpu_info().vmem_capacity_bytes)
    except Exception:
        vmem_capacity = 64 << 20                         # conservative (v7x per-TC)

    # ~capacity/10 per input buffer: ~12 MiB tiles on 128 MiB parts, ~6 MiB on v7x.
    target_bytes = int(min(max(vmem_capacity // 10, 2 << 20), 16 << 20))
    in_row_bytes = HW_pad * C_pad * itemsize
    TB = _pick_batch_tile(B, in_row_bytes, target_bytes)
    grid = (pl.cdiv(B, TB),)                             # partial last block is clipped by Pallas

    out_shape = (
        jax.ShapeDtypeStruct((B, NC), jnp.float32),      # logits
        jax.ShapeDtypeStruct((B, C), x.dtype),           # pooled feature (input dtype)
        jax.ShapeDtypeStruct((B, NC), jnp.float32),      # sigmoid(logits)
    )

    # VMEM budget: double-buffered tiles with real (padded) footprints + headroom,
    # capped at 3/4 of physical VMEM.
    tb_pad = _round_up(TB, sub_granule)
    in_tile_bytes = TB * HW_pad * C_pad * itemsize
    feat_tile_bytes = tb_pad * C_pad * itemsize
    logit_tile_bytes = _round_up(TB, 8) * NC_pad * 4
    w_tile_bytes = C_pad * NC_pad * 4
    needed = 2 * (in_tile_bytes + feat_tile_bytes + 2 * logit_tile_bytes + w_tile_bytes) + (4 << 20)
    vmem_limit = int(min(max(needed, 16 << 20), (vmem_capacity * 3) // 4))

    # Mem-bound kernel: advertise the dominant HBM traffic to XLA's scheduler.
    bytes_accessed = (B * HW * C * itemsize
                      + NC * C * 4
                      + B * C * itemsize + 2 * B * NC * 4)
    cost = pl.CostEstimate(flops=2 * B * C * (HW + NC),
                           transcendentals=B * NC,
                           bytes_accessed=bytes_accessed)

    return pl.pallas_call(
        _sccam_head_kernel,
        out_shape=out_shape,
        grid_spec=pl.GridSpec(
            grid=grid,
            in_specs=[
                pl.BlockSpec((TB, HW, C), lambda i: (i, 0, 0)),
                pl.BlockSpec((C, NC), lambda i: (0, 0)),
            ],
            out_specs=[
                pl.BlockSpec((TB, NC), lambda i: (i, 0)),
                pl.BlockSpec((TB, C), lambda i: (i, 0)),
                pl.BlockSpec((TB, NC), lambda i: (i, 0)),
            ],
        ),
        compiler_params=pltpu.CompilerParams(
            dimension_semantics=("parallel",),           # batch steps are independent
            vmem_limit_bytes=vmem_limit),
        cost_estimate=cost,
    )(x, w)


def sccam_head(feat_map_nchw, fc8_weight):
    """NCHW convenience wrapper (PyTorch layout).  The NCHW->NHWC transpose is a full HBM
    round-trip done by XLA outside the kernel; production backbones should emit channels-last
    and call sccam_head_nhwc directly."""
    x_bhwc = jnp.transpose(feat_map_nchw, (0, 2, 3, 1))
    return sccam_head_nhwc(x_bhwc, fc8_weight)


def xavier_uniform_conv(key, out_ch, in_ch):
    # torch.nn.init.xavier_uniform_ on a (out_ch, in_ch, 1, 1) conv weight:
    # fan_in = in_ch, fan_out = out_ch, bound = sqrt(6 / (fan_in + fan_out)).
    bound = (6.0 / (in_ch + out_ch)) ** 0.5
    return jax.random.uniform(key, (out_ch, in_ch, 1, 1),
                              minval=-bound, maxval=bound, dtype=jnp.float32)


if __name__ == "__main__":
    key = jax.random.PRNGKey(0)
    k_x, k_w, k_x2 = jax.random.split(key, 3)

    # Small stand-in shapes for the backbone output (real resnet50: C=2048, HW=49).
    B, C, H, W = 2, 128, 8, 8
    NUM_CLASSES = 8
    fc8_weight = xavier_uniform_conv(k_w, NUM_CLASSES, C)
    w2d = fc8_weight.reshape(NUM_CLASSES, C)

    # --- f32, channels-last production path ---------------------------------------------------
    feat_map_nhwc = jax.random.normal(k_x, (B, H, W, C), dtype=jnp.float32)
    logits, feature, y = sccam_head_nhwc(feat_map_nhwc, fc8_weight)
    jax.block_until_ready((logits, feature, y))

    feat_ref = jnp.mean(feat_map_nhwc.reshape(B, H * W, C), axis=1)
    logit_ref = feat_ref @ w2d.T
    y_ref = jax.nn.sigmoid(logit_ref)
    assert jnp.allclose(feature, feat_ref, atol=1e-5, rtol=1e-5)
    assert jnp.allclose(logits, logit_ref, atol=1e-4, rtol=1e-4)
    assert jnp.allclose(y, y_ref, atol=1e-4, rtol=1e-4)

    # --- NCHW convenience wrapper (same data) --------------------------------------------------
    feat_map_nchw = jnp.transpose(feat_map_nhwc, (0, 3, 1, 2))
    logits_w, feature_w, y_w = sccam_head(feat_map_nchw, fc8_weight)
    jax.block_until_ready((logits_w, feature_w, y_w))
    assert jnp.allclose(logits_w, logit_ref, atol=1e-4, rtol=1e-4)

    # --- bf16, larger batch: multi-step grid + partial last block (cdiv path) ------------------
    B2 = 20                                            # TB=8 -> grid=3, last block holds 4 rows
    feat_map_b2 = jax.random.normal(k_x2, (B2, H, W, C), dtype=jnp.float32)
    feat_map_bf16 = feat_map_b2.astype(jnp.bfloat16)
    logits_b, feature_b, y_b = sccam_head_nhwc(feat_map_bf16, fc8_weight)
    jax.block_until_ready((logits_b, feature_b, y_b))

    x_b32 = feat_map_bf16.astype(jnp.float32)
    feat_ref_b = jnp.mean(x_b32.reshape(B2, H * W, C), axis=1)
    logit_ref_b = feat_ref_b @ w2d.T
    assert feature_b.dtype == jnp.bfloat16
    assert jnp.allclose(feature_b.astype(jnp.float32), feat_ref_b, atol=2e-2, rtol=2e-2)
    assert jnp.allclose(logits_b, logit_ref_b, atol=2e-2, rtol=2e-2)
    assert jnp.allclose(y_b, jax.nn.sigmoid(logit_ref_b), atol=2e-2, rtol=2e-2)

    print("KERNEL_OK")
</pallas_src>

<mosaic_0001>
module attributes {stable_mosaic.version = 11 : i64} {
  func.func @_sccam_head_kernel(%arg0: i32, %arg1: memref<2x64x128xf32, #tpu.memory_space<vmem>>, %arg2: memref<128x8xf32, #tpu.memory_space<vmem>>, %arg3: memref<2x8xf32, #tpu.memory_space<vmem>>, %arg4: memref<2x128xf32, #tpu.memory_space<vmem>>, %arg5: memref<2x8xf32, #tpu.memory_space<vmem>>) attributes {dimension_semantics = [#tpu.dimension_semantics<parallel>], iteration_bounds = array<i64: 1>, scalar_prefetch = 0 : i64, scratch_operands = 0 : i64, tpu.core_type = #tpu.core_type<tc>, window_params = [{transform_indices = @transform_0, window_bounds = array<i64: 2, 64, 128>}, {pipeline_mode = #tpu.pipeline_mode<synchronous>, transform_indices = @transform_1, window_bounds = array<i64: 128, 8>}, {transform_indices = @transform_2, window_bounds = array<i64: 2, 8>}, {transform_indices = @transform_3, window_bounds = array<i64: 2, 128>}, {transform_indices = @transform_4, window_bounds = array<i64: 2, 8>}]} {
    %c0 = arith.constant 0 : index
    %c0_0 = arith.constant 0 : index
    %c0_1 = arith.constant 0 : index
    %0 = vector.load %arg1[%c0, %c0_0, %c0_1] : memref<2x64x128xf32, #tpu.memory_space<vmem>>, vector<2x64x128xf32>
    %cst = arith.constant dense<0.000000e+00> : vector<2x128xf32>
    %1 = vector.multi_reduction <add>, %0, %cst [1] : vector<2x64x128xf32> to vector<2x128xf32>
    %cst_2 = arith.constant 6.400000e+01 : f32
    %2 = vector.broadcast %cst_2 : f32 to vector<2x128xf32>
    %3 = arith.divf %1, %2 : vector<2x128xf32>
    %c0_3 = arith.constant 0 : index
    %c0_4 = arith.constant 0 : index
    %4 = vector.load %arg4[%c0_3, %c0_4] : memref<2x128xf32, #tpu.memory_space<vmem>>, vector<2x128xf32>
    tpu.vector_store %arg4[%c0_3, %c0_4], %3 {strides = array<i32>} : memref<2x128xf32, #tpu.memory_space<vmem>>, vector<2x128xf32>,
    %c0_5 = arith.constant 0 : index
    %c0_6 = arith.constant 0 : index
    %5 = vector.load %arg2[%c0_5, %c0_6] : memref<128x8xf32, #tpu.memory_space<vmem>>, vector<128x8xf32>
    %cst_7 = arith.constant dense<0.000000e+00> : vector<2x8xf32>
    %6 = tpu.matmul %3, %5, %cst_7 {dimension_numbers = #tpu.dot_dimension_numbers<[1], [0], [0], [1], [0, 0, 1, 1], [], []>} : vector<2x128xf32>, vector<128x8xf32>, vector<2x8xf32> -> vector<2x8xf32>
    %c0_8 = arith.constant 0 : index
    %c0_9 = arith.constant 0 : index
    %7 = vector.load %arg3[%c0_8, %c0_9] : memref<2x8xf32, #tpu.memory_space<vmem>>, vector<2x8xf32>
    tpu.vector_store %arg3[%c0_8, %c0_9], %6 {strides = array<i32>} : memref<2x8xf32, #tpu.memory_space<vmem>>, vector<2x8xf32>,
    %8 = arith.negf %6 : vector<2x8xf32>
    %9 = math.exp %8 : vector<2x8xf32>
    %cst_10 = arith.constant 1.000000e+00 : f32
    %10 = vector.broadcast %cst_10 : f32 to vector<2x8xf32>
    %11 = arith.addf %10, %9 : vector<2x8xf32>
    %12 = arith.divf %10, %11 : vector<2x8xf32>
    %c0_11 = arith.constant 0 : index
    %c0_12 = arith.constant 0 : index
    %13 = vector.load %arg5[%c0_11, %c0_12] : memref<2x8xf32, #tpu.memory_space<vmem>>, vector<2x8xf32>
    tpu.vector_store %arg5[%c0_11, %c0_12], %12 {strides = array<i32>} : memref<2x8xf32, #tpu.memory_space<vmem>>, vector<2x8xf32>,
    return
  }
  func.func @transform_0(%arg0: i32) -> (i32, i32, i32) {
    %c0_i32 = arith.constant 0 : i32
    %c0_i32_0 = arith.constant 0 : i32
    %c0_i32_1 = arith.constant 0 : i32
    return %arg0, %c0_i32, %c0_i32_0 : i32, i32, i32
  }
  func.func @transform_1(%arg0: i32) -> (i32, i32) {
    %c0_i32 = arith.constant 0 : i32
    %c0_i32_0 = arith.constant 0 : i32
    %c0_i32_1 = arith.constant 0 : i32
    return %c0_i32, %c0_i32_0 : i32, i32
  }
  func.func @transform_2(%arg0: i32) -> (i32, i32) {
    %c0_i32 = arith.constant 0 : i32
    %c0_i32_0 = arith.constant 0 : i32
    return %arg0, %c0_i32 : i32, i32
  }
  func.func @transform_3(%arg0: i32) -> (i32, i32) {
    %c0_i32 = arith.constant 0 : i32
    %c0_i32_0 = arith.constant 0 : i32
    return %arg0, %c0_i32 : i32, i32
  }
  func.func @transform_4(%arg0: i32) -> (i32, i32) {
    %c0_i32 = arith.constant 0 : i32
    %c0_i32_0 = arith.constant 0 : i32
    return %arg0, %c0_i32 : i32, i32
  }
}

</mosaic_0001>

<llo_original>
// kernel: tpu_custom_call.1
$region0: #{tpu_custom_call.1}
  #allocation0 [shape = 'u32[]', space=smem, size = 0x4, offset = 0x4, fixed_abs, tag = 'smem constant byte address 0x4 - core index']
  #allocation1 [shape = 'u32[72,128]{1,0:T(1,128)}', space=vmem, size = 0x9000, scoped, tag = 'internal scratch']
  %s0 = inlined_call_operand.vmem [shape: f32[2,64,128], index: 0, kind: input, shape index: {}]
  %s1 = inlined_call_operand.vmem [shape: f32[128,8], index: 1, kind: input, shape index: {}]
  %s2 = inlined_call_operand.hbm [shape: f32[2,8], index: 2, kind: output, shape index: {0}]
  %s3 = inlined_call_operand.hbm [shape: f32[2,128], index: 3, kind: output, shape index: {1}]
  %s4 = inlined_call_operand.hbm [shape: f32[2,8], index: 4, kind: output, shape index: {2}]
  %5 = xla_tuple %s2, %s3, %s4
  %s6 = sld [smem:[#allocation0]]
  $region34: #{tpu_custom_call.1} parent=0
    _
  %s8 = ssub.s32 1, %s6
  %s9 = scalar_select 0, %s8, %s6
  $region1: #{tpu_custom_call.1} parent=0
    #allocation2 [shape = 'u8[1024]{0}', space=vmem, size = 0x400, scoped, tag = 'output window, operand 0, single buffered']
    #allocation3 [shape = 's32[1]{0}', space=sflag, size = 0x4, scoped, tag = 'scoped memory for tpu_custom_call.1']
    #allocation4 [shape = 'u8[1024]{0}', space=vmem, size = 0x400, scoped, tag = 'output window, operand 1, single buffered']
    #allocation5 [shape = 's32[1]{0}', space=sflag, size = 0x4, scoped, tag = 'scoped memory for tpu_custom_call.1']
    #allocation6 [shape = 'u8[1024]{0}', space=vmem, size = 0x400, scoped, tag = 'output window, operand 2, single buffered']
    %10 = vsyncpa [#allocation3], 0
    %11 = vsyncpa [#allocation5], 0
    // Predicated region
    $region2: #{tpu_custom_call.1} parent=1 // pred_check
      _
    $region3: #{tpu_custom_call.1} parent=1 // pred_check_branch
      %13 = sbr.rel (0) target = $region5
    $region4: #{tpu_custom_call.1} parent=1 // pred_region
      _
    $region5: #{tpu_custom_call.1} parent=1 // pred_fallthru
      _
    // Predicated region
    $region6: #{tpu_custom_call.1} parent=1 // pred_check
      _
    $region7: #{tpu_custom_call.1} parent=1 // pred_check_branch
      %15 = sbr.rel (0) target = $region9
    $region8: #{tpu_custom_call.1} parent=1 // pred_region
      _
    $region9: #{tpu_custom_call.1} parent=1 // pred_fallthru
      _
    %v16 = vld [vmem:[%s0] sm:$0xff]
    %v17 = vld [vmem:[%s0 + $0x8] sm:$0xff]
    %v18 = vld [vmem:[%s0 + $0x10] sm:$0xff]
    %v19 = vld [vmem:[%s0 + $0x18] sm:$0xff]
    %v20 = vld [vmem:[%s0 + $0x20] sm:$0xff]
    %v21 = vld [vmem:[%s0 + $0x28] sm:$0xff]
    %v22 = vld [vmem:[%s0 + $0x30] sm:$0xff]
    %v23 = vld [vmem:[%s0 + $0x38] sm:$0xff]
    %v24 = vld [vmem:[%s0 + $0x40] sm:$0xff]
    %v25 = vld [vmem:[%s0 + $0x48] sm:$0xff]
    %v26 = vld [vmem:[%s0 + $0x50] sm:$0xff]
    %v27 = vld [vmem:[%s0 + $0x58] sm:$0xff]
    %v28 = vld [vmem:[%s0 + $0x60] sm:$0xff]
    %v29 = vld [vmem:[%s0 + $0x68] sm:$0xff]
    %v30 = vld [vmem:[%s0 + $0x70] sm:$0xff]
    %v31 = vld [vmem:[%s0 + $0x78] sm:$0xff]
    %v32 = vadd.f32 %v16, %v17
    %v33 = vadd.f32 %v32, %v18
    %v34 = vadd.f32 %v33, %v19
    %v35 = vadd.f32 %v34, %v20
    %v36 = vadd.f32 %v35, %v21
    %v37 = vadd.f32 %v36, %v22
    %v38 = vadd.f32 %v37, %v23
    %v39 = vrot.slane %v38, 4
    %v40 = vadd.f32 %v38, %v39
    %v41 = vrot.slane %v40, 2
    %v42 = vadd.f32 %v40, %v41
    %v43 = vrot.slane %v42, 1
    %v44 = vadd.f32 %v42, %v43
    %v45 = vadd.f32 %v24, %v25
    %v46 = vadd.f32 %v45, %v26
    %v47 = vadd.f32 %v46, %v27
    %v48 = vadd.f32 %v47, %v28
    %v49 = vadd.f32 %v48, %v29
    %v50 = vadd.f32 %v49, %v30
    %v51 = vadd.f32 %v50, %v31
    %v52 = vrot.slane %v51, 4
    %v53 = vadd.f32 %v51, %v52
    %v54 = vrot.slane %v53, 2
    %v55 = vadd.f32 %v53, %v54
    %v56 = vrot.slane %v55, 1
    %v57 = vadd.f32 %v55, %v56
    %v58 = vrcp.pop 64.0
    %v59 = vmul.f32 64.0, %v58
    %v60 = vsub.f32 1.0, %v59
    %v61 = vmul.f32 %v58, %v60
    %v62 = vadd.f32 %v58, %v61
    %vm63 = vweird.f32 %v58
    %v64 = vsel %vm63, %v58, %v62
    %v65 = vmul.f32 %v44, %v64
    %v66 = vmul.f32 %v57, %v64
    %vm69 = vcmask 1041409
    %v70 = vsel %vm69, %v66, %v65
    %72 = vst [vmem:[#allocation4] sm:$0x3] %v70
    %v73 = vld [vmem:[%s1] sm:$0xff]
    %v74 = vld [vmem:[%s1 + $0x8] sm:$0xff]
    %v75 = vld [vmem:[%s1 + $0x10] sm:$0xff]
    %v76 = vld [vmem:[%s1 + $0x18] sm:$0xff]
    %v77 = vld [vmem:[%s1 + $0x20] sm:$0xff]
    %v78 = vld [vmem:[%s1 + $0x28] sm:$0xff]
    %v79 = vld [vmem:[%s1 + $0x30] sm:$0xff]
    %v80 = vld [vmem:[%s1 + $0x38] sm:$0xff]
    %v81 = vld [vmem:[%s1 + $0x40] sm:$0xff]
    %v82 = vld [vmem:[%s1 + $0x48] sm:$0xff]
    %v83 = vld [vmem:[%s1 + $0x50] sm:$0xff]
    %v84 = vld [vmem:[%s1 + $0x58] sm:$0xff]
    %v85 = vld [vmem:[%s1 + $0x60] sm:$0xff]
    %v86 = vld [vmem:[%s1 + $0x68] sm:$0xff]
    %v87 = vld [vmem:[%s1 + $0x70] sm:$0xff]
    %v88 = vld [vmem:[%s1 + $0x78] sm:$0xff]
    %89 = vmatpush.msra.mxu0 %v88
    %90 = vmatpush.msra.mxu0 %v87
    %91 = vmatpush.msra.mxu0 %v86
    %92 = vmatpush.msra.mxu0 %v85
    %93 = vmatpush.msra.mxu0 %v84
    %94 = vmatpush.msra.mxu0 %v83
    %95 = vmatpush.msra.mxu0 %v82
    %96 = vmatpush.msra.mxu0 %v81
    %97 = vmatpush.msra.mxu0 %v80
    %98 = vmatpush.msra.mxu0 %v79
    %99 = vmatpush.msra.mxu0 %v78
    %100 = vmatpush.msra.mxu0 %v77
    %101 = vmatpush.msra.mxu0 %v76
    %102 = vmatpush.msra.mxu0 %v75
    %103 = vmatpush.msra.mxu0 %v74
    %104 = vmatpush.msra.mxu0 %v73
    %105 = vmatmul.f32.gmra.mxu0 %v70
    %v106 = vpop.f32.mrf.mxu0
    %v107 = vadd.f32 0.0, %v106
    %108 = vdwg.mxu0
    %vm109 = vcmask 58368
    %110 = vst.msk [vmem:[#allocation2] sm:$0x3] %vm109, %v107
    %v111 = vxor.u32 %v107, 2147483648
    %v112 = vmul.f32 %v111, 1.442695
    %v113 = vpow.pop %v112
    %v114 = vadd.f32 %v113, 1.0
    %v115 = vrcp.pop %v114
    %v116 = vmul.f32 %v114, %v115
    %v117 = vsub.f32 1.0, %v116
    %v118 = vmul.f32 %v115, %v117
    %v119 = vadd.f32 %v115, %v118
    %vm120 = vweird.f32 %v114
    %vm121 = vweird.f32 %v115
    %vm122 = vmor %vm120, %vm121
    %v123 = vsel %vm122, %v115, %v119
    %v124 = vand.u32 2147483647, %v114
    %vm125 = vcmp.eq.f32.partialorder %v124, 8.507059e+37
    %v126 = vand.u32 %v114, 2147483648
    %v127 = vor.u32 1.1754944e-38, %v126
    %v128 = vsel %vm125, %v127, %v123
    %v129 = vmul.f32 1.0, %v128
    %130 = vst.msk [vmem:[#allocation6] sm:$0x3] %vm109, %v129
    // Predicated region
    $region10: #{tpu_custom_call.1} parent=1 // pred_check
      _
    $region11: #{tpu_custom_call.1} parent=1 // pred_check_branch
      %132 = sbr.rel (0) target = $region13
    $region12: #{tpu_custom_call.1} parent=1 // pred_region
      %134 = vsyncadd [#allocation3], 0
      %s136 = sshll.u32 [#allocation2], 4
      %s137 = int_to_ptr.vmem [resolvable:$true] %s136
      %s138 = sshll.u32 %s2, 4
      %s139 = int_to_ptr.hbm [resolvable:$true] %s138
      %141 = dma.vmem_to_hbm [thread:$0]  %s137, 32, %s139, [#allocation3]
    $region13: #{tpu_custom_call.1} parent=1 // pred_fallthru
      _
    // Predicated region
    $region14: #{tpu_custom_call.1} parent=1 // pred_check
      _
    $region15: #{tpu_custom_call.1} parent=1 // pred_check_branch
      %143 = sbr.rel (0) target = $region17
    $region16: #{tpu_custom_call.1} parent=1 // pred_region
      %145 = vsyncadd [#allocation5], 0
      %s147 = sshll.u32 [#allocation4], 4
      %s148 = int_to_ptr.vmem [resolvable:$true] %s147
      %s149 = sshll.u32 %s3, 4
      %s150 = int_to_ptr.hbm [resolvable:$true] %s149
      %152 = dma.vmem_to_hbm [thread:$0]  %s148, 32, %s150, [#allocation5]
    $region17: #{tpu_custom_call.1} parent=1 // pred_fallthru
      _
    // Predicated region
    $region18: #{tpu_custom_call.1} parent=1 // pred_check
      _
    $region19: #{tpu_custom_call.1} parent=1 // pred_check_branch
      %154 = sbr.rel (0) target = $region21
    $region20: #{tpu_custom_call.1} parent=1 // pred_region
      %156 = vsyncadd [#allocation5], 0
      %s158 = sshll.u32 [#allocation6], 4
      %s159 = int_to_ptr.vmem [resolvable:$true] %s158
      %s160 = sshll.u32 %s4, 4
      %s161 = int_to_ptr.hbm [resolvable:$true] %s160
      %163 = dma.vmem_to_hbm [thread:$0]  %s159, 32, %s161, [#allocation5]
    $region21: #{tpu_custom_call.1} parent=1 // pred_fallthru
      _
    // Predicated region
    $region22: #{tpu_custom_call.1} parent=1 // pred_check
      _
    $region23: #{tpu_custom_call.1} parent=1 // pred_check_branch
      %165 = sbr.rel (0) target = $region25
    $region24: #{tpu_custom_call.1} parent=1 // pred_region
      %167 = dma.done [#allocation3], 32
    $region25: #{tpu_custom_call.1} parent=1 // pred_fallthru
      _
    // Predicated region
    $region26: #{tpu_custom_call.1} parent=1 // pred_check
      _
    $region27: #{tpu_custom_call.1} parent=1 // pred_check_branch
      %169 = sbr.rel (0) target = $region29
    $region28: #{tpu_custom_call.1} parent=1 // pred_region
      %171 = dma.done [#allocation5], 32
    $region29: #{tpu_custom_call.1} parent=1 // pred_fallthru
      _
    // Predicated region
    $region30: #{tpu_custom_call.1} parent=1 // pred_check
      _
    $region31: #{tpu_custom_call.1} parent=1 // pred_check_branch
      %173 = sbr.rel (0) target = $region33
    $region32: #{tpu_custom_call.1} parent=1 // pred_region
      %175 = dma.done [#allocation5], 32
    $region33: #{tpu_custom_call.1} parent=1 // pred_fallthru
      _
    %176 = vsyncpa [#allocation3], 1
    %177 = vsyncpa [#allocation5], 1

</llo_original>
